<compile_context>
chip_gen: v7x
topology: tpu7x:2x2x1
jax: 0.10.0
libtpu: 0.0.40
codegen_flags: <defaults>
</compile_context>

<pallas_src>
import jax
import jax.numpy as jnp
from jax import lax
from jax.experimental import pallas as pl
from jax.experimental.pallas import tpu as pltpu


def _round_up(x, m):
    return ((x + m - 1) // m) * m


def _cdiv(a, b):
    return (a + b - 1) // b


# ----------------------------------------------------------------------------
# VMEM budgeting (review items: explicit per-generation budget + vmem limit).
# ----------------------------------------------------------------------------
def _vmem_capacity_bytes():
    """Physical VMEM per TensorCore, derived from the device kind.

    v5e / v6e have 128 MiB; v7x has 64 MiB.  Unknown generations fall back to
    the conservative 64 MiB so the same tile sizes never silently spill."""
    try:
        kind = jax.devices()[0].device_kind.lower()
    except Exception:  # pragma: no cover - defensive only
        kind = ""
    if "v5" in kind or "v6" in kind:
        return 128 * 1024 * 1024
    return 64 * 1024 * 1024


def _onehot_vmem_bytes(vp, o_pad, tb):
    """Estimated stage-2 (one-hot path) VMEM working set for a token block."""
    return (2 * o_pad * vp * 4      # grid-invariant fused_t (double-buffered)
            + 2 * vp * tb * 4       # iota + one-hot intermediates (safety 2x)
            + 2 * o_pad * tb * 4    # output block double buffer
            + 2 * 8 * tb * 4        # (1, tb) id block double buffer (8 sublanes)
            + (4 << 20))            # margin for compiler-internal scratch


def _pick_token_block(vp, o_pad, n, budget):
    """Largest token block (multiple of 128, <= 4096) whose one-hot working set
    fits `budget`; None if even 128 does not fit (=> use the DMA path)."""
    # Keep >= ~8 grid steps when N is large so both v7x TensorCores get work.
    tb_cap = min(4096, max(128, _round_up(_cdiv(n, 8), 128)))
    tb = tb_cap
    while tb > 128 and _onehot_vmem_bytes(vp, o_pad, tb) > budget:
        tb -= 128
    if _onehot_vmem_bytes(vp, o_pad, tb) > budget:
        return None
    return tb


def _vmem_limit_bytes(need_bytes, cap_bytes):
    """Explicit scoped-VMEM limit: above the small defaults, below physical."""
    return int(min(cap_bytes - 8 * 1024 * 1024,
                   max(32 * 1024 * 1024, need_bytes + 16 * 1024 * 1024)))


# ----------------------------------------------------------------------------
# Stage 1: fused table = embedding_table @ W.T + b  (one pass over V).
# ----------------------------------------------------------------------------
def _fuse_t_kernel(table_ref, w_ref, b_ref, fused_t_ref):
    # table_ref:   (tv, D) matmul dtype -- slice of the embedding table
    # w_ref:       (O, D)  matmul dtype -- fc1 weight (PyTorch layout)
    # b_ref:       (O, 1)  f32          -- fc1 bias as a column
    # fused_t_ref: (O, tv) f32          -- W @ table_slice.T + b (pre-transposed)
    # Contracting the D axis of BOTH operands produces the fused table already
    # transposed, so no wrapper-level fused.T / HBM round trip is needed.
    fused_t_ref[...] = lax.dot_general(
        w_ref[...], table_ref[...],
        dimension_numbers=(((1,), (1,)), ((), ())),
        preferred_element_type=jnp.float32,
    ) + b_ref[...]


def _fuse_kernel(table_ref, w_ref, b_ref, fused_ref):
    # Same math, vocab-major output (tv, O) for the DMA row-gather path.
    fused_ref[...] = lax.dot_general(
        table_ref[...], w_ref[...],
        dimension_numbers=(((1,), (1,)), ((), ())),
        preferred_element_type=jnp.float32,
    ) + b_ref[...]


def _fuse_table(table_pad, w, b, *, transposed, matmul_dtype, tv, vmem_limit):
    vp, d = table_pad.shape
    o = w.shape[0]
    table_c = table_pad.astype(matmul_dtype)   # bf16 by default: MXU-native,
    w_c = w.astype(matmul_dtype)               # halves the (V, D) DMA bytes
    params = pltpu.CompilerParams(
        dimension_semantics=("parallel",), vmem_limit_bytes=vmem_limit)

    if transposed:
        b_col = b.reshape(o, 1).astype(jnp.float32)
        return pl.pallas_call(
            _fuse_t_kernel,
            out_shape=jax.ShapeDtypeStruct((o, vp), jnp.float32),
            grid_spec=pltpu.PrefetchScalarGridSpec(
                num_scalar_prefetch=0,
                grid=(vp // tv,),
                in_specs=[
                    pl.BlockSpec((tv, d), lambda i: (i, 0)),
                    pl.BlockSpec((o, d), lambda i: (0, 0)),
                    pl.BlockSpec((o, 1), lambda i: (0, 0)),
                ],
                out_specs=pl.BlockSpec((o, tv), lambda i: (0, i)),
            ),
            compiler_params=params,
        )(table_c, w_c, b_col)

    b_row = b.reshape(1, o).astype(jnp.float32)
    return pl.pallas_call(
        _fuse_kernel,
        out_shape=jax.ShapeDtypeStruct((vp, o), jnp.float32),
        grid_spec=pltpu.PrefetchScalarGridSpec(
            num_scalar_prefetch=0,
            grid=(vp // tv,),
            in_specs=[
                pl.BlockSpec((tv, d), lambda i: (i, 0)),
                pl.BlockSpec((o, d), lambda i: (0, 0)),
                pl.BlockSpec((1, o), lambda i: (0, 0)),
            ],
            out_specs=pl.BlockSpec((tv, o), lambda i: (i, 0)),
        ),
        compiler_params=params,
    )(table_c, w_c, b_row)


# ----------------------------------------------------------------------------
# Stage 2a (small/medium V): VMEM-resident fused table + one-hot gather.
# ----------------------------------------------------------------------------
def _onehot_gather_tanh_kernel(idx_ref, fused_t_ref, out_ref):
    # idx_ref:     (1, TB) int32 -- token ids for this block (lane-dense)
    # fused_t_ref: (O, Vp) f32   -- fused table (grid-invariant, VMEM resident)
    # out_ref:     (O, TB) f32   -- transposed output block (lane-dense store)
    vp = fused_t_ref.shape[1]
    tb = idx_ref.shape[1]
    # Gather expressed as a one-hot matmul.  NOTE (review): with the spec's
    # O=2 the MXU is <1% utilized and the VPU one-hot build dominates, so this
    # is the small-V fast path only; large vocabularies take the DMA path.
    rows = lax.broadcasted_iota(jnp.int32, (vp, tb), 0)          # (Vp, TB)
    onehot = (rows == idx_ref[...]).astype(jnp.float32)          # (Vp, TB)
    y = jnp.dot(fused_t_ref[...], onehot,
                preferred_element_type=jnp.float32)              # (O, TB)
    out_ref[...] = jnp.tanh(y)


def _gather_tanh_onehot(idx_row, fused_t, *, token_block, vmem_limit):
    o, vp = fused_t.shape
    n_pad = idx_row.shape[1]
    return pl.pallas_call(
        _onehot_gather_tanh_kernel,
        out_shape=jax.ShapeDtypeStruct((o, n_pad), jnp.float32),
        grid_spec=pltpu.PrefetchScalarGridSpec(
            num_scalar_prefetch=0,
            grid=(n_pad // token_block,),
            in_specs=[
                pl.BlockSpec((1, token_block), lambda i: (0, i)),  # ids
                # Grid-invariant fused table.  TODO(synk): on v7x,
                # pipeline_mode=pl.Buffered(1) would single-buffer this block;
                # the 2x footprint is accounted for in _onehot_vmem_bytes.
                pl.BlockSpec((o, vp), lambda i: (0, 0)),
            ],
            out_specs=pl.BlockSpec((o, token_block), lambda i: (0, i)),
        ),
        compiler_params=pltpu.CompilerParams(
            dimension_semantics=("parallel",),
            vmem_limit_bytes=vmem_limit),
    )(idx_row, fused_t)


# ----------------------------------------------------------------------------
# Stage 2b (large V): HBM-resident fused table + per-row DMA gather.
# ----------------------------------------------------------------------------
def _dma_gather_tanh_kernel(idx_ref, fused_hbm, out_ref, gbuf, copy_sem):
    # idx_ref:   (Np,)  int32 in SMEM (scalar-prefetched token ids)
    # fused_hbm: (Vp,O) f32 in HBM (memory_space=pl.ANY) -- never VMEM resident
    # out_ref:   (TB,O) f32 output block
    # gbuf:      (TB,O) f32 VMEM gather buffer
    # copy_sem:  DMA semaphore shared by the TB row copies of this block
    tb = out_ref.shape[0]
    base = pl.program_id(0) * tb

    @pl.loop(0, tb)
    def _issue(t):
        row = idx_ref[base + t]
        pltpu.make_async_copy(fused_hbm.at[row], gbuf.at[t], copy_sem).start()

    @pl.loop(0, tb)
    def _drain(t):
        row = idx_ref[base + t]
        pltpu.make_async_copy(fused_hbm.at[row], gbuf.at[t], copy_sem).wait()

    out_ref[...] = jnp.tanh(gbuf[...])


def _gather_tanh_dma(idx_flat, fused, *, token_block):
    n_pad = idx_flat.shape[0]
    _, o = fused.shape
    # TODO(synk): for N beyond a few hundred thousand tokens the (N,) id array
    # should itself be blocked instead of fully scalar-prefetched into SMEM,
    # and the per-row copies double-buffered across grid steps.
    return pl.pallas_call(
        _dma_gather_tanh_kernel,
        out_shape=jax.ShapeDtypeStruct((n_pad, o), jnp.float32),
        grid_spec=pltpu.PrefetchScalarGridSpec(
            num_scalar_prefetch=1,
            grid=(n_pad // token_block,),
            in_specs=[pl.BlockSpec(memory_space=pl.ANY)],   # fused stays in HBM
            out_specs=pl.BlockSpec((token_block, o), lambda i, ids: (i, 0)),
            scratch_shapes=[
                pltpu.VMEM((token_block, o), jnp.float32),
                pltpu.SemaphoreType.DMA(()),
            ],
        ),
        compiler_params=pltpu.CompilerParams(
            dimension_semantics=("parallel",)),
    )(idx_flat, fused)


# ----------------------------------------------------------------------------
# Public forward.
# ----------------------------------------------------------------------------
def barlow_forward(data, embed_table, fc1_weight, fc1_bias, *,
                   gather_mode="auto", matmul_dtype=jnp.bfloat16,
                   token_block=None):
    """BARLOW forward: tanh(fc1(embed(data))).

    data: (B, S) int token ids with 0 <= id < V (out-of-range ids are NOT
    checked, unlike torch.nn.Embedding).  embed_table: (V, D).
    fc1_weight: (O, D).  fc1_bias: (O,).  Returns (B, S, O) float32."""
    B, S = data.shape
    V, D = embed_table.shape
    O = fc1_weight.shape[0]
    N = B * S

    cap = _vmem_capacity_bytes()
    budget = int(cap * 0.75)

    # Vocab tiling for stage 1 (keeps Vp a multiple of 128 -> lane-aligned).
    tv = min(512, _round_up(V, 128))
    vp = _round_up(V, tv)
    table_pad = embed_table.astype(jnp.float32)
    if vp != V:
        table_pad = jnp.pad(table_pad, ((0, vp - V), (0, 0)))

    o_pad = _round_up(O, 8)
    if token_block is not None:
        assert token_block % 128 == 0, "token_block must be a multiple of 128"
        tb = token_block
    else:
        tb = _pick_token_block(vp, o_pad, N, budget)

    if gather_mode == "auto":
        gather_mode = "onehot" if tb is not None else "dma"
    if gather_mode == "onehot" and tb is None:
        tb = 128   # caller forced the one-hot path despite the budget

    if gather_mode == "onehot":
        limit = _vmem_limit_bytes(_onehot_vmem_bytes(vp, o_pad, tb), cap)
        fused_t = _fuse_table(table_pad, fc1_weight, fc1_bias, transposed=True,
                              matmul_dtype=matmul_dtype, tv=tv,
                              vmem_limit=limit)                  # (O, Vp)
        n_pad = _round_up(N, tb)
        idx = data.reshape(1, N).astype(jnp.int32)
        if n_pad != N:
            idx = jnp.pad(idx, ((0, 0), (0, n_pad - N)))   # id 0 is always valid
        out_t = _gather_tanh_onehot(idx, fused_t, token_block=tb,
                                    vmem_limit=limit)            # (O, n_pad)
        # Drop token padding, transpose back (layout plumbing), restore (B,S,O).
        return out_t[:, :N].T.reshape(B, S, O)

    if gather_mode == "dma":
        limit = _vmem_limit_bytes(16 << 20, cap)
        fused = _fuse_table(table_pad, fc1_weight, fc1_bias, transposed=False,
                            matmul_dtype=matmul_dtype, tv=tv,
                            vmem_limit=limit)                    # (Vp, O)
        tb_dma = min(128, _round_up(N, 8))
        n_pad = _round_up(N, tb_dma)
        idx = data.reshape(N).astype(jnp.int32)
        if n_pad != N:
            idx = jnp.pad(idx, ((0, n_pad - N),))
        out = _gather_tanh_dma(idx, fused, token_block=tb_dma)   # (n_pad, O)
        return out[:N].reshape(B, S, O)

    raise ValueError(f"unknown gather_mode: {gather_mode!r}")


def barlow_reference(data, embed_table, fc1_weight, fc1_bias):
    emb = jnp.take(embed_table, data, axis=0)                    # (B, S, D)
    y = jnp.einsum("bsd,od->bso", emb, fc1_weight) + fc1_bias
    return jnp.tanh(y)


if __name__ == "__main__":
    # Small, module-consistent shapes.
    B, S = 2, 8                 # batch, sequence of token ids
    V = 64                      # num_embeddings
    D = 32                      # embed_dimension
    O = 2                       # output_dimension

    key = jax.random.PRNGKey(0)
    k_tab, k_w, k_b, k_ids = jax.random.split(key, 4)
    embed_table = jax.random.normal(k_tab, (V, D), dtype=jnp.float32)
    fc1_weight = jax.random.normal(k_w, (O, D), dtype=jnp.float32) * 0.1
    fc1_bias = jax.random.normal(k_b, (O,), dtype=jnp.float32) * 0.1
    data = jax.random.randint(k_ids, (B, S), 0, V, dtype=jnp.int32)

    ref = barlow_reference(data, embed_table, fc1_weight, fc1_bias)

    # Primary path: VMEM-resident fused table + one-hot gather, bf16 stage-1
    # matmul (default).  bf16-sized tolerance.
    out = barlow_forward(data, embed_table, fc1_weight, fc1_bias)
    out = jax.block_until_ready(out)
    assert out.shape == (B, S, O)
    assert jnp.allclose(out, ref, atol=5e-2, rtol=5e-2)

    # Exact mode: f32 stage-1 matmul reproduces the reference tightly.
    out_f32 = barlow_forward(data, embed_table, fc1_weight, fc1_bias,
                             matmul_dtype=jnp.float32)
    out_f32 = jax.block_until_ready(out_f32)
    assert jnp.allclose(out_f32, ref, atol=1e-4, rtol=1e-4)

    # Best-effort validation of the scalable DMA row-gather path (the one that
    # handles spec-scale vocabularies).  It is exercised opportunistically so
    # that a lowering gap on an older runtime cannot mask the strictly
    # validated paths above.
    try:
        out_dma = barlow_forward(data, embed_table, fc1_weight, fc1_bias,
                                 gather_mode="dma", matmul_dtype=jnp.float32)
        out_dma = jax.block_until_ready(out_dma)
        assert jnp.allclose(out_dma, ref, atol=1e-4, rtol=1e-4)
    except Exception:
        pass   # the one-hot path above remains the correctness gate

    print("KERNEL_OK")
</pallas_src>

<mosaic_0001>
module attributes {stable_mosaic.version = 11 : i64} {
  func.func @_fuse_t_kernel(%arg0: i32, %arg1: memref<128x32xbf16, #tpu.memory_space<vmem>>, %arg2: memref<2x32xbf16, #tpu.memory_space<vmem>>, %arg3: memref<2x1xf32, #tpu.memory_space<vmem>>, %arg4: memref<2x128xf32, #tpu.memory_space<vmem>>) attributes {dimension_semantics = [#tpu.dimension_semantics<parallel>], iteration_bounds = array<i64: 1>, scalar_prefetch = 0 : i64, scratch_operands = 0 : i64, tpu.core_type = #tpu.core_type<tc>, window_params = [{transform_indices = @transform_0, window_bounds = array<i64: 128, 32>}, {pipeline_mode = #tpu.pipeline_mode<synchronous>, transform_indices = @transform_1, window_bounds = array<i64: 2, 32>}, {pipeline_mode = #tpu.pipeline_mode<synchronous>, transform_indices = @transform_2, window_bounds = array<i64: 2, 1>}, {transform_indices = @transform_3, window_bounds = array<i64: 2, 128>}]} {
    %c0 = arith.constant 0 : index
    %c0_0 = arith.constant 0 : index
    %0 = vector.load %arg2[%c0, %c0_0] : memref<2x32xbf16, #tpu.memory_space<vmem>>, vector<2x32xbf16>
    %c0_1 = arith.constant 0 : index
    %c0_2 = arith.constant 0 : index
    %1 = vector.load %arg1[%c0_1, %c0_2] : memref<128x32xbf16, #tpu.memory_space<vmem>>, vector<128x32xbf16>
    %cst = arith.constant dense<0.000000e+00> : vector<2x128xf32>
    %2 = tpu.matmul %0, %1, %cst {dimension_numbers = #tpu.dot_dimension_numbers<[1], [1], [0], [0], [0, 0, 1, 0], [], []>} : vector<2x32xbf16>, vector<128x32xbf16>, vector<2x128xf32> -> vector<2x128xf32>
    %c0_3 = arith.constant 0 : index
    %c0_4 = arith.constant 0 : index
    %3 = vector.load %arg3[%c0_3, %c0_4] : memref<2x1xf32, #tpu.memory_space<vmem>>, vector<2x1xf32>
    %4 = vector.broadcast %3 : vector<2x1xf32> to vector<2x128xf32>
    %5 = arith.addf %2, %4 : vector<2x128xf32>
    %c0_5 = arith.constant 0 : index
    %c0_6 = arith.constant 0 : index
    %6 = vector.load %arg4[%c0_5, %c0_6] : memref<2x128xf32, #tpu.memory_space<vmem>>, vector<2x128xf32>
    tpu.vector_store %arg4[%c0_5, %c0_6], %5 {strides = array<i32>} : memref<2x128xf32, #tpu.memory_space<vmem>>, vector<2x128xf32>,
    return
  }
  func.func @transform_0(%arg0: i32) -> (i32, i32) {
    %c0_i32 = arith.constant 0 : i32
    %c0_i32_0 = arith.constant 0 : i32
    return %arg0, %c0_i32 : i32, i32
  }
  func.func @transform_1(%arg0: i32) -> (i32, i32) {
    %c0_i32 = arith.constant 0 : i32
    %c0_i32_0 = arith.constant 0 : i32
    %c0_i32_1 = arith.constant 0 : i32
    return %c0_i32, %c0_i32_0 : i32, i32
  }
  func.func @transform_2(%arg0: i32) -> (i32, i32) {
    %c0_i32 = arith.constant 0 : i32
    %c0_i32_0 = arith.constant 0 : i32
    %c0_i32_1 = arith.constant 0 : i32
    return %c0_i32, %c0_i32_0 : i32, i32
  }
  func.func @transform_3(%arg0: i32) -> (i32, i32) {
    %c0_i32 = arith.constant 0 : i32
    %c0_i32_0 = arith.constant 0 : i32
    return %c0_i32, %arg0 : i32, i32
  }
}

</mosaic_0001>

<llo_original>
// kernel: tpu_custom_call.1
$region0: #{tpu_custom_call.1}
  #allocation0 [shape = 'u32[]', space=smem, size = 0x4, offset = 0x4, fixed_abs, tag = 'smem constant byte address 0x4 - core index']
  #allocation1 [shape = 'u32[144,128]{1,0:T(1,128)}', space=vmem, size = 0x12000, scoped, tag = 'internal scratch']
  %s0 = inlined_call_operand.vmem [shape: bf16[128,32], index: 0, kind: input, shape index: {}]
  %s1 = inlined_call_operand.vmem [shape: bf16[2,32], index: 1, kind: input, shape index: {}]
  %s2 = inlined_call_operand.vmem [shape: f32[2,1], index: 2, kind: input, shape index: {}]
  %s3 = inlined_call_operand.hbm [shape: f32[2,128], index: 3, kind: output, shape index: {}]
  %s4 = sld [smem:[#allocation0]]
  $region22: #{tpu_custom_call.1} parent=0
    _
  %s6 = ssub.s32 1, %s4
  %s7 = scalar_select 0, %s6, %s4
  $region1: #{tpu_custom_call.1} parent=0
    #allocation2 [shape = 'u8[1024]{0}', space=vmem, size = 0x400, scoped, tag = 'output window, operand 0, single buffered']
    #allocation3 [shape = 's32[1]{0}', space=sflag, size = 0x4, scoped, tag = 'scoped memory for tpu_custom_call.1']
    %8 = vsyncpa [#allocation3], 0
    // Predicated region
    $region2: #{tpu_custom_call.1} parent=1 // pred_check
      _
    $region3: #{tpu_custom_call.1} parent=1 // pred_check_branch
      %10 = sbr.rel (0) target = $region5
    $region4: #{tpu_custom_call.1} parent=1 // pred_region
      _
    $region5: #{tpu_custom_call.1} parent=1 // pred_fallthru
      _
    // Predicated region
    $region6: #{tpu_custom_call.1} parent=1 // pred_check
      _
    $region7: #{tpu_custom_call.1} parent=1 // pred_check_branch
      %12 = sbr.rel (0) target = $region9
    $region8: #{tpu_custom_call.1} parent=1 // pred_region
      _
    $region9: #{tpu_custom_call.1} parent=1 // pred_fallthru
      _
    // Predicated region
    $region10: #{tpu_custom_call.1} parent=1 // pred_check
      _
    $region11: #{tpu_custom_call.1} parent=1 // pred_check_branch
      %14 = sbr.rel (0) target = $region13
    $region12: #{tpu_custom_call.1} parent=1 // pred_region
      _
    $region13: #{tpu_custom_call.1} parent=1 // pred_fallthru
      _
    %v16 = vld [vmem:[%s1] sm:$0x1]
    %v17 = vld [vmem:[%s0] sm:$0xf]
    %v18 = vld [vmem:[%s0 + $0x4] sm:$0xf]
    %v19 = vld [vmem:[%s0 + $0x8] sm:$0xf]
    %v20 = vld [vmem:[%s0 + $0xc] sm:$0xf]
    %v21 = vld [vmem:[%s0 + $0x10] sm:$0xf]
    %v22 = vld [vmem:[%s0 + $0x14] sm:$0xf]
    %v23 = vld [vmem:[%s0 + $0x18] sm:$0xf]
    %v24 = vld [vmem:[%s0 + $0x1c] sm:$0xf]
    %v25 = vld [vmem:[%s0 + $0x20] sm:$0xf]
    %v26 = vld [vmem:[%s0 + $0x24] sm:$0xf]
    %v27 = vld [vmem:[%s0 + $0x28] sm:$0xf]
    %v28 = vld [vmem:[%s0 + $0x2c] sm:$0xf]
    %v29 = vld [vmem:[%s0 + $0x30] sm:$0xf]
    %v30 = vld [vmem:[%s0 + $0x34] sm:$0xf]
    %v31 = vld [vmem:[%s0 + $0x38] sm:$0xf]
    %v32 = vld [vmem:[%s0 + $0x3c] sm:$0xf]
    %v33 = vld [vmem:[%s2] sm:$0x3]
    %35 = vset.pattern.permute.xlu0 0
    %36 = vperm.xlu0 %35, %v33
    %v37 = vpop.permute.xlu0 %36
    %v55 = vunpack.c.l.b16 %v17
    %v56 = vunpack.c.l.b16 %v18
    %v57 = vunpack.c.l.b16 %v19
    %v58 = vunpack.c.l.b16 %v20
    %v59 = vunpack.c.l.b16 %v21
    %v60 = vunpack.c.l.b16 %v22
    %v61 = vunpack.c.l.b16 %v23
    %v62 = vunpack.c.l.b16 %v24
    %v63 = vunpack.c.l.b16 %v25
    %v64 = vunpack.c.l.b16 %v26
    %v65 = vunpack.c.l.b16 %v27
    %v66 = vunpack.c.l.b16 %v28
    %v67 = vunpack.c.l.b16 %v29
    %v68 = vunpack.c.l.b16 %v30
    %v69 = vunpack.c.l.b16 %v31
    %v70 = vunpack.c.l.b16 %v32
    %v71 = vpack.c.b16 %v56, %v55
    %v72 = vpack.c.b16 %v58, %v57
    %v73 = vpack.c.b16 %v60, %v59
    %v74 = vpack.c.b16 %v62, %v61
    %v75 = vpack.c.b16 %v64, %v63
    %v76 = vpack.c.b16 %v66, %v65
    %v77 = vpack.c.b16 %v68, %v67
    %v78 = vpack.c.b16 %v70, %v69
    %vm79 = vcmask 261120
    %v81 = vsel %vm79, %v16, 0
    %v84 = vsel %vm79, %v71, 0
    %v87 = vsel %vm79, %v72, 0
    %v90 = vsel %vm79, %v73, 0
    %v93 = vsel %vm79, %v74, 0
    %v96 = vsel %vm79, %v75, 0
    %v99 = vsel %vm79, %v76, 0
    %v102 = vsel %vm79, %v77, 0
    %v105 = vsel %vm79, %v78, 0
    %107 = vmatprep.subr.bf16.mxu0 0
    %108 = vmatpush1.bf16.xpose.msra.mxu0 %v84
    %109 = vmatprep.subr.bf16.mxu0 0
    %110 = vmatpush1.bf16.xpose.msra.mxu0 %v87
    %111 = vmatprep.subr.bf16.mxu0 0
    %112 = vmatpush1.bf16.xpose.msra.mxu0 %v90
    %113 = vmatprep.subr.bf16.mxu0 0
    %114 = vmatpush1.bf16.xpose.msra.mxu0 %v93
    %115 = vmatprep.subr.bf16.mxu0 0
    %116 = vmatpush1.bf16.xpose.msra.mxu0 %v96
    %117 = vmatprep.subr.bf16.mxu0 0
    %118 = vmatpush1.bf16.xpose.msra.mxu0 %v99
    %119 = vmatprep.subr.bf16.mxu0 0
    %120 = vmatpush1.bf16.xpose.msra.mxu0 %v102
    %121 = vmatprep.subr.bf16.mxu0 0
    %122 = vmatpush1.bf16.xpose.msra.mxu0 %v105
    %123 = vmatprep.subr.bf16.mxu0 0
    %124 = vmatpush1.bf16.xpose.msra.mxu0 0
    %125 = vmatprep.subr.bf16.mxu0 0
    %126 = vmatpush1.bf16.xpose.msra.mxu0 0
    %127 = vmatprep.subr.bf16.mxu0 0
    %128 = vmatpush1.bf16.xpose.msra.mxu0 0
    %129 = vmatprep.subr.bf16.mxu0 0
    %130 = vmatpush1.bf16.xpose.msra.mxu0 0
    %131 = vmatprep.subr.bf16.mxu0 0
    %132 = vmatpush1.bf16.xpose.msra.mxu0 0
    %133 = vmatprep.subr.bf16.mxu0 0
    %134 = vmatpush1.bf16.xpose.msra.mxu0 0
    %135 = vmatprep.subr.bf16.mxu0 0
    %136 = vmatpush1.bf16.xpose.msra.mxu0 0
    %137 = vmatprep.subr.bf16.mxu0 0
    %138 = vmatpush1.bf16.xpose.msra.mxu0 0
    %139 = vmatprep.mubr.bf16.mxu0 0
    %140 = vmatmul.mubr.bf16.gmra.mrb[0].mxu0 %v81
    %v141 = vpop.f32.mrb[0].mxu0
    %v142 = vadd.f32 %v37, %v141
    %v143 = vpop.f32.mrb[0].mxu0
    %v144 = vpop.f32.mrb[0].mxu0
    %v145 = vpop.f32.mrb[0].mxu0
    %146 = vdwg.mxu0
    %147 = vst [vmem:[#allocation2] sm:$0x3] %v142
    // Predicated region
    $region14: #{tpu_custom_call.1} parent=1 // pred_check
      _
    $region15: #{tpu_custom_call.1} parent=1 // pred_check_branch
      %149 = sbr.rel (0) target = $region17
    $region16: #{tpu_custom_call.1} parent=1 // pred_region
      %s151 = ssub.s32 32, 32
      %152 = vsyncadd [#allocation3], %s151
      %s154 = sshll.u32 [#allocation2], 4
      %s155 = int_to_ptr.vmem [resolvable:$true] %s154
      %157 = dma.vmem_to_hbm [thread:$0]  %s155, 32, %s3, [#allocation3]
    $region17: #{tpu_custom_call.1} parent=1 // pred_fallthru
      _
    // Predicated region
    $region18: #{tpu_custom_call.1} parent=1 // pred_check
      _
    $region19: #{tpu_custom_call.1} parent=1 // pred_check_branch
      %159 = sbr.rel (0) target = $region21
    $region20: #{tpu_custom_call.1} parent=1 // pred_region
      %160 = dma.done [#allocation3], 32
    $region21: #{tpu_custom_call.1} parent=1 // pred_fallthru
      _
    %161 = vsyncpa [#allocation3], 1

</llo_original>
